<compile_context>
chip_gen: v6e
topology: v6e:2x2x1
jax: 0.10.0
libtpu: 0.0.40
codegen_flags: <defaults>
</compile_context>

<pallas_src>
import numpy as np
import jax
import jax.numpy as jnp
from jax.experimental import pallas as pl
from jax.experimental.pallas import tpu as pltpu


_OUT_POOL = 6                              # AdaptiveAvgPool2d output size
_PAD = 2                                   # ZeroPad2d padding
_OUT_SPATIAL = _OUT_POOL + 2 * _PAD        # 10
_OUT_FEATS = _OUT_SPATIAL * _OUT_SPATIAL   # 100


def _adaptive_pool_pad_matrix(in_size: int, out_size: int, pad: int) -> np.ndarray:
    """P of shape (out_size + 2*pad, in_size) s.t. P @ v == zero_pad(adaptive_avg_pool_1d(v), pad)."""
    P = np.zeros((out_size + 2 * pad, in_size), dtype=np.float32)
    for i in range(out_size):
        start = (i * in_size) // out_size
        end = -((-(i + 1) * in_size) // out_size)  # ceil((i+1)*in_size/out_size)
        P[pad + i, start:end] = 1.0 / (end - start)
    return P


def make_folded_constants(w_lin, b_lin, H: int, W: int):
    """Fold AdaptiveAvgPool2d(6) + ZeroPad2d(2) + Linear(10,10) into (K, bias_row).

    K: (H*W, 100) with K[h*W + w, p*10 + o] = PH[p, h] * (PW^T @ W_lin^T)[w, o]
    bias_row: (1, 100) = tile(b_lin, 10)
    Precompute once and pass to the wrapper when w_lin / b_lin are static.
    """
    ph = jnp.asarray(_adaptive_pool_pad_matrix(H, _OUT_POOL, _PAD))   # (10, H)
    pw = jnp.asarray(_adaptive_pool_pad_matrix(W, _OUT_POOL, _PAD))   # (10, W)
    r = jnp.dot(pw.T, w_lin.astype(jnp.float32).T,
                precision=jax.lax.Precision.HIGHEST)                  # (W, 10)
    k = jnp.einsum("ph,wo->hwpo", ph, r,
                   precision=jax.lax.Precision.HIGHEST).reshape(H * W, _OUT_FEATS)
    b_row = jnp.tile(b_lin.astype(jnp.float32), _OUT_SPATIAL).reshape(1, _OUT_FEATS)
    return k, b_row


def _kernel(x_ref, k_ref, b_ref, o_ref):
    # x_ref: (TM, H*W)   k_ref: (H*W, 100)   b_ref: (1, 100)   o_ref: (TM, 100)
    xs = x_ref[...].astype(jnp.float32)                       # bf16 inputs upcast in VMEM
    # Hardswish: x * relu6(x + 3) / 6   (elementwise, VPU — hidden under the input DMA)
    hs = xs * jnp.clip(xs + 3.0, 0.0, 6.0) * (1.0 / 6.0)
    # Fused pool + pad + linear as a single GEMM on the MXU.
    y = jnp.dot(hs, k_ref[...], preferred_element_type=jnp.float32)
    o_ref[...] = (y + b_ref[...]).astype(o_ref.dtype)


def _choose_tile(M: int, block_m: int) -> int:
    """Tile rows: one block if it all fits, else an even number of near-equal blocks
    (multiples of 8 rows) so a 2-TensorCore (v7x) 'parallel' grid stays balanced."""
    if M <= block_m:
        return M                              # block == full dim; no (8,128) issue
    nb = -(-M // block_m)                     # min #blocks at requested size
    if nb % 2:
        nb += 1                               # even block count for megacore balance
    tm = ((-(-M // nb) + 7) // 8) * 8         # balanced size, rounded up to 8 rows
    return min(tm, block_m)


def activation_bias_correction_pad_net(x, w_lin, b_lin, *, folded=None, block_m: int = 2048):
    """x: (N, C, H, W) float32/bf16. w_lin: (10, 10), b_lin: (10,). Returns (N, C, 10, 10) f32."""
    N, C, H, W = x.shape
    M = N * C
    HW = H * W

    if folded is None:
        folded = make_folded_constants(w_lin, b_lin, H, W)
    k, b_row = folded

    # Lane-dense input: each (H, W) slice flattened to one length-HW row.
    # No dtype cast here — a cast would materialize a second full-size HBM copy.
    xm = x.reshape(M, HW)

    tm = _choose_tile(M, block_m)
    grid = (pl.cdiv(M, tm),)   # ragged last block is fine: OOB output rows are dropped
    # NOTE: if block_m is ever pushed past ~4096, set vmem_limit_bytes explicitly and
    # budget against v7x's 32 MiB scoped / 64 MiB physical VMEM.

    itemsize = jnp.dtype(x.dtype).itemsize
    cost = pl.CostEstimate(
        flops=2 * M * HW * _OUT_FEATS + 4 * M * HW,
        transcendentals=0,
        bytes_accessed=M * HW * itemsize + (M + HW + 1) * _OUT_FEATS * 4,
    )

    out = pl.pallas_call(
        _kernel,
        out_shape=jax.ShapeDtypeStruct((M, _OUT_FEATS), jnp.float32),
        grid_spec=pltpu.PrefetchScalarGridSpec(
            num_scalar_prefetch=0,
            grid=grid,
            in_specs=[
                pl.BlockSpec((tm, HW), lambda i: (i, 0)),            # x batch tile
                pl.BlockSpec((HW, _OUT_FEATS), lambda i: (0, 0)),    # folded constant K
                pl.BlockSpec((1, _OUT_FEATS), lambda i: (0, 0)),     # tiled bias row
            ],
            out_specs=pl.BlockSpec((tm, _OUT_FEATS), lambda i: (i, 0)),
        ),
        compiler_params=pltpu.CompilerParams(
            dimension_semantics=("parallel",),
        ),
        cost_estimate=cost,
    )(xm, k, b_row)

    # (M, 100) -> (N, C, 10, 10) is a free view (no HBM copy).
    return out.reshape(N, C, _OUT_SPATIAL, _OUT_SPATIAL)


def _reference(x, w_lin, b_lin):
    """Pure-JAX reference for validation."""
    hs = x * jnp.clip(x + 3.0, 0.0, 6.0) / 6.0
    H, W = x.shape[-2:]
    ph = jnp.asarray(_adaptive_pool_pad_matrix(H, _OUT_POOL, _PAD))
    pw = jnp.asarray(_adaptive_pool_pad_matrix(W, _OUT_POOL, _PAD))
    padded = jnp.einsum("ph,nchw,qw->ncpq", ph, hs, pw)
    return jnp.einsum("ncpq,oq->ncpo", padded, w_lin) + b_lin


if __name__ == "__main__":
    key = jax.random.PRNGKey(0)
    kx, kw, kb = jax.random.split(key, 3)

    N, C, H, W = 2, 4, 16, 16
    x = jax.random.normal(kx, (N, C, H, W), dtype=jnp.float32)
    # Deterministic synthetic Linear(10, 10) parameters (not a checkpoint load).
    w_lin = jax.random.normal(kw, (10, 10), dtype=jnp.float32) * 0.1
    b_lin = jax.random.normal(kb, (10,), dtype=jnp.float32) * 0.1

    out = jax.block_until_ready(activation_bias_correction_pad_net(x, w_lin, b_lin))
    ref = jax.block_until_ready(_reference(x, w_lin, b_lin))
    np.testing.assert_allclose(np.asarray(out), np.asarray(ref), rtol=1e-3, atol=1e-4)

    # Ragged-grid path (M=15 not a multiple of the 8-row tile): exercises the no-pad
    # wrapper and the dropped OOB output writes of the last block.
    x2 = jax.random.normal(kx, (3, 5, H, W), dtype=jnp.float32)
    out2 = jax.block_until_ready(
        activation_bias_correction_pad_net(x2, w_lin, b_lin, block_m=8))
    ref2 = jax.block_until_ready(_reference(x2, w_lin, b_lin))
    np.testing.assert_allclose(np.asarray(out2), np.asarray(ref2), rtol=1e-3, atol=1e-4)

    print("KERNEL_OK")
</pallas_src>

<mosaic_0001>
module attributes {stable_mosaic.version = 11 : i64} {
  func.func @_kernel(%arg0: i32, %arg1: memref<8x256xf32, #tpu.memory_space<vmem>>, %arg2: memref<256x100xf32, #tpu.memory_space<vmem>>, %arg3: memref<1x100xf32, #tpu.memory_space<vmem>>, %arg4: memref<8x100xf32, #tpu.memory_space<vmem>>) attributes {dimension_semantics = [#tpu.dimension_semantics<parallel>], iteration_bounds = array<i64: 1>, scalar_prefetch = 0 : i64, scratch_operands = 0 : i64, tpu.core_type = #tpu.core_type<tc>, window_params = [{transform_indices = @transform_0, window_bounds = array<i64: 8, 256>}, {pipeline_mode = #tpu.pipeline_mode<synchronous>, transform_indices = @transform_1, window_bounds = array<i64: 256, 100>}, {pipeline_mode = #tpu.pipeline_mode<synchronous>, transform_indices = @transform_2, window_bounds = array<i64: 1, 100>}, {transform_indices = @transform_3, window_bounds = array<i64: 8, 100>}]} {
    %c0 = arith.constant 0 : index
    %c0_0 = arith.constant 0 : index
    %0 = vector.load %arg1[%c0, %c0_0] : memref<8x256xf32, #tpu.memory_space<vmem>>, vector<8x256xf32>
    %cst = arith.constant 3.000000e+00 : f32
    %1 = vector.broadcast %cst : f32 to vector<8x256xf32>
    %2 = arith.addf %0, %1 : vector<8x256xf32>
    %cst_1 = arith.constant 0.000000e+00 : f32
    %cst_2 = arith.constant 6.000000e+00 : f32
    %3 = vector.broadcast %cst_1 : f32 to vector<8x256xf32>
    %4 = arith.maximumf %3, %2 : vector<8x256xf32>
    %5 = vector.broadcast %cst_2 : f32 to vector<8x256xf32>
    %6 = arith.minimumf %5, %4 : vector<8x256xf32>
    %7 = arith.mulf %0, %6 : vector<8x256xf32>
    %cst_3 = arith.constant 0.166666672 : f32
    %8 = vector.broadcast %cst_3 : f32 to vector<8x256xf32>
    %9 = arith.mulf %7, %8 : vector<8x256xf32>
    %c0_4 = arith.constant 0 : index
    %c0_5 = arith.constant 0 : index
    %10 = vector.load %arg2[%c0_4, %c0_5] : memref<256x100xf32, #tpu.memory_space<vmem>>, vector<256x100xf32>
    %cst_6 = arith.constant dense<0.000000e+00> : vector<8x100xf32>
    %11 = tpu.matmul %9, %10, %cst_6 {dimension_numbers = #tpu.dot_dimension_numbers<[1], [0], [0], [1], [0, 0, 1, 1], [], []>} : vector<8x256xf32>, vector<256x100xf32>, vector<8x100xf32> -> vector<8x100xf32>
    %c0_7 = arith.constant 0 : index
    %c0_8 = arith.constant 0 : index
    %12 = vector.load %arg3[%c0_7, %c0_8] : memref<1x100xf32, #tpu.memory_space<vmem>>, vector<1x100xf32>
    %13 = vector.broadcast %12 : vector<1x100xf32> to vector<8x100xf32>
    %14 = arith.addf %11, %13 : vector<8x100xf32>
    %c0_9 = arith.constant 0 : index
    %c0_10 = arith.constant 0 : index
    %15 = vector.load %arg4[%c0_9, %c0_10] : memref<8x100xf32, #tpu.memory_space<vmem>>, vector<8x100xf32>
    tpu.vector_store %arg4[%c0_9, %c0_10], %14 {strides = array<i32>} : memref<8x100xf32, #tpu.memory_space<vmem>>, vector<8x100xf32>,
    return
  }
  func.func @transform_0(%arg0: i32) -> (i32, i32) {
    %c0_i32 = arith.constant 0 : i32
    %c0_i32_0 = arith.constant 0 : i32
    return %arg0, %c0_i32 : i32, i32
  }
  func.func @transform_1(%arg0: i32) -> (i32, i32) {
    %c0_i32 = arith.constant 0 : i32
    %c0_i32_0 = arith.constant 0 : i32
    %c0_i32_1 = arith.constant 0 : i32
    return %c0_i32, %c0_i32_0 : i32, i32
  }
  func.func @transform_2(%arg0: i32) -> (i32, i32) {
    %c0_i32 = arith.constant 0 : i32
    %c0_i32_0 = arith.constant 0 : i32
    %c0_i32_1 = arith.constant 0 : i32
    return %c0_i32, %c0_i32_0 : i32, i32
  }
  func.func @transform_3(%arg0: i32) -> (i32, i32) {
    %c0_i32 = arith.constant 0 : i32
    %c0_i32_0 = arith.constant 0 : i32
    return %arg0, %c0_i32 : i32, i32
  }
}

</mosaic_0001>

<llo_original>
// kernel: tpu_custom_call.1
$region0: #{tpu_custom_call.1}
  #allocation0 [shape = 'u32[]', space=smem, size = 0x4, offset = 0x4, fixed_abs, tag = 'smem constant byte address 0x4 - core index']
  #allocation1 [shape = 'u32[144,128]{1,0:T(1,128)}', space=vmem, size = 0x12000, scoped, tag = 'internal scratch']
  %s0 = inlined_call_operand.vmem [shape: f32[8,256], index: 0, kind: input, shape index: {}]
  %s1 = inlined_call_operand.vmem [shape: f32[256,100], index: 1, kind: input, shape index: {}]
  %s2 = inlined_call_operand.vmem [shape: f32[1,100], index: 2, kind: input, shape index: {}]
  %s3 = inlined_call_operand.hbm [shape: f32[8,100], index: 3, kind: output, shape index: {}]
  %s4 = sld [smem:[#allocation0]]
  $region22: #{tpu_custom_call.1} parent=0
    _
  %s6 = ssub.s32 1, %s4
  %s7 = scalar_select 0, %s6, %s4
  $region1: #{tpu_custom_call.1} parent=0
    #allocation2 [shape = 'u8[4096]{0}', space=vmem, size = 0x1000, scoped, tag = 'output window, operand 0, single buffered']
    #allocation3 [shape = 's32[1]{0}', space=sflag, size = 0x4, scoped, tag = 'scoped memory for tpu_custom_call.1']
    %8 = vsyncpa [#allocation3], 0
    // Predicated region
    $region2: #{tpu_custom_call.1} parent=1 // pred_check
      _
    $region3: #{tpu_custom_call.1} parent=1 // pred_check_branch
      %10 = sbr.rel (0) target = $region5
    $region4: #{tpu_custom_call.1} parent=1 // pred_region
      _
    $region5: #{tpu_custom_call.1} parent=1 // pred_fallthru
      _
    // Predicated region
    $region6: #{tpu_custom_call.1} parent=1 // pred_check
      _
    $region7: #{tpu_custom_call.1} parent=1 // pred_check_branch
      %12 = sbr.rel (0) target = $region9
    $region8: #{tpu_custom_call.1} parent=1 // pred_region
      _
    $region9: #{tpu_custom_call.1} parent=1 // pred_fallthru
      _
    // Predicated region
    $region10: #{tpu_custom_call.1} parent=1 // pred_check
      _
    $region11: #{tpu_custom_call.1} parent=1 // pred_check_branch
      %14 = sbr.rel (0) target = $region13
    $region12: #{tpu_custom_call.1} parent=1 // pred_region
      _
    $region13: #{tpu_custom_call.1} parent=1 // pred_fallthru
      _
    %v15 = vld [vmem:[%s0] sm:$0xff]
    %v16 = vld [vmem:[%s0 + $0x8] sm:$0xff]
    %v17 = vadd.f32 %v15, 3.0
    %v18 = vadd.f32 %v16, 3.0
    %v19 = vmax.f32 %v17, 0.0
    %v20 = vmax.f32 %v18, 0.0
    %v21 = vmin.f32 %v19, 6.0
    %v22 = vmin.f32 %v20, 6.0
    %v23 = vmul.f32 %v15, %v21
    %v24 = vmul.f32 %v16, %v22
    %v25 = vmul.f32 %v23, 0.16666667
    %v26 = vmul.f32 %v24, 0.16666667
    %v27 = vld [vmem:[%s1] sm:$0xff]
    %v28 = vld [vmem:[%s1 + $0x8] sm:$0xff]
    %v29 = vld [vmem:[%s1 + $0x10] sm:$0xff]
    %v30 = vld [vmem:[%s1 + $0x18] sm:$0xff]
    %v31 = vld [vmem:[%s1 + $0x20] sm:$0xff]
    %v32 = vld [vmem:[%s1 + $0x28] sm:$0xff]
    %v33 = vld [vmem:[%s1 + $0x30] sm:$0xff]
    %v34 = vld [vmem:[%s1 + $0x38] sm:$0xff]
    %v35 = vld [vmem:[%s1 + $0x40] sm:$0xff]
    %v36 = vld [vmem:[%s1 + $0x48] sm:$0xff]
    %v37 = vld [vmem:[%s1 + $0x50] sm:$0xff]
    %v38 = vld [vmem:[%s1 + $0x58] sm:$0xff]
    %v39 = vld [vmem:[%s1 + $0x60] sm:$0xff]
    %v40 = vld [vmem:[%s1 + $0x68] sm:$0xff]
    %v41 = vld [vmem:[%s1 + $0x70] sm:$0xff]
    %v42 = vld [vmem:[%s1 + $0x78] sm:$0xff]
    %v43 = vld [vmem:[%s1 + $0x80] sm:$0xff]
    %v44 = vld [vmem:[%s1 + $0x88] sm:$0xff]
    %v45 = vld [vmem:[%s1 + $0x90] sm:$0xff]
    %v46 = vld [vmem:[%s1 + $0x98] sm:$0xff]
    %v47 = vld [vmem:[%s1 + $0xa0] sm:$0xff]
    %v48 = vld [vmem:[%s1 + $0xa8] sm:$0xff]
    %v49 = vld [vmem:[%s1 + $0xb0] sm:$0xff]
    %v50 = vld [vmem:[%s1 + $0xb8] sm:$0xff]
    %v51 = vld [vmem:[%s1 + $0xc0] sm:$0xff]
    %v52 = vld [vmem:[%s1 + $0xc8] sm:$0xff]
    %v53 = vld [vmem:[%s1 + $0xd0] sm:$0xff]
    %v54 = vld [vmem:[%s1 + $0xd8] sm:$0xff]
    %v55 = vld [vmem:[%s1 + $0xe0] sm:$0xff]
    %v56 = vld [vmem:[%s1 + $0xe8] sm:$0xff]
    %v57 = vld [vmem:[%s1 + $0xf0] sm:$0xff]
    %v58 = vld [vmem:[%s1 + $0xf8] sm:$0xff]
    %v59 = vld [vmem:[%s2] sm:$0x1]
    %v61 = vlaneseq
    %v62 = vshrl.u32 %v61, 7
    %v63 = vsub.s32 0, %v62
    %v64 = vrot.slane %v59, %v63
    %66 = vmatprep.subr.mxu0 0.0
    %67 = vmatpush1.msra.mxu0 %v42
    %68 = vmatprep.subr.mxu0 0.0
    %69 = vmatpush1.msra.mxu0 %v41
    %70 = vmatprep.subr.mxu0 0.0
    %71 = vmatpush1.msra.mxu0 %v40
    %72 = vmatprep.subr.mxu0 0.0
    %73 = vmatpush1.msra.mxu0 %v39
    %74 = vmatprep.subr.mxu0 0.0
    %75 = vmatpush1.msra.mxu0 %v38
    %76 = vmatprep.subr.mxu0 0.0
    %77 = vmatpush1.msra.mxu0 %v37
    %78 = vmatprep.subr.mxu0 0.0
    %79 = vmatpush1.msra.mxu0 %v36
    %80 = vmatprep.subr.mxu0 0.0
    %81 = vmatpush1.msra.mxu0 %v35
    %82 = vmatprep.subr.mxu0 0.0
    %83 = vmatpush1.msra.mxu0 %v34
    %84 = vmatprep.subr.mxu0 0.0
    %85 = vmatpush1.msra.mxu0 %v33
    %86 = vmatprep.subr.mxu0 0.0
    %87 = vmatpush1.msra.mxu0 %v32
    %88 = vmatprep.subr.mxu0 0.0
    %89 = vmatpush1.msra.mxu0 %v31
    %90 = vmatprep.subr.mxu0 0.0
    %91 = vmatpush1.msra.mxu0 %v30
    %92 = vmatprep.subr.mxu0 0.0
    %93 = vmatpush1.msra.mxu0 %v29
    %94 = vmatprep.subr.mxu0 0.0
    %95 = vmatpush1.msra.mxu0 %v28
    %96 = vmatprep.subr.mxu0 0.0
    %97 = vmatpush1.msra.mxu0 %v27
    %98 = vmatprep.subr.mxu0 0.0
    %99 = vmatpush2.msra.mxu0 %v58
    %100 = vmatprep.subr.mxu0 0.0
    %101 = vmatpush2.msra.mxu0 %v57
    %102 = vmatprep.subr.mxu0 0.0
    %103 = vmatpush2.msra.mxu0 %v56
    %104 = vmatprep.subr.mxu0 0.0
    %105 = vmatpush2.msra.mxu0 %v55
    %106 = vmatprep.subr.mxu0 0.0
    %107 = vmatpush2.msra.mxu0 %v54
    %108 = vmatprep.subr.mxu0 0.0
    %109 = vmatpush2.msra.mxu0 %v53
    %110 = vmatprep.subr.mxu0 0.0
    %111 = vmatpush2.msra.mxu0 %v52
    %112 = vmatprep.subr.mxu0 0.0
    %113 = vmatpush2.msra.mxu0 %v51
    %114 = vmatprep.subr.mxu0 0.0
    %115 = vmatpush2.msra.mxu0 %v50
    %116 = vmatprep.subr.mxu0 0.0
    %117 = vmatpush2.msra.mxu0 %v49
    %118 = vmatprep.subr.mxu0 0.0
    %119 = vmatpush2.msra.mxu0 %v48
    %120 = vmatprep.subr.mxu0 0.0
    %121 = vmatpush2.msra.mxu0 %v47
    %122 = vmatprep.subr.mxu0 0.0
    %123 = vmatpush2.msra.mxu0 %v46
    %124 = vmatprep.subr.mxu0 0.0
    %125 = vmatpush2.msra.mxu0 %v45
    %126 = vmatprep.subr.mxu0 0.0
    %127 = vmatpush2.msra.mxu0 %v44
    %128 = vmatprep.subr.mxu0 0.0
    %129 = vmatpush2.msra.mxu0 %v43
    %130 = vmatprep.mubr.f32.mxu0 %v26
    %131 = vmatmul.mubr.f32.gmra.mxu0 %v25
    %v132 = vpop.f32.mrf.mxu0
    %v133 = vadd.f32 %v64, %v132
    %v134 = vpop.f32.mrf.mxu0
    %135 = vdwg.mxu0
    %vm136 = vcmask 818176
    %137 = vst.msk [vmem:[#allocation2] sm:$0xff] %vm136, %v133
    // Predicated region
    $region14: #{tpu_custom_call.1} parent=1 // pred_check
      _
    $region15: #{tpu_custom_call.1} parent=1 // pred_check_branch
      %139 = sbr.rel (0) target = $region17
    $region16: #{tpu_custom_call.1} parent=1 // pred_region
      %s141 = ssub.s32 128, 128
      %142 = vsyncadd [#allocation3], %s141
      %s144 = sshll.u32 [#allocation2], 4
      %s145 = int_to_ptr.vmem [resolvable:$true] %s144
      %147 = dma.vmem_to_hbm [thread:$0]  %s145, 128, %s3, [#allocation3]
    $region17: #{tpu_custom_call.1} parent=1 // pred_fallthru
      _
    // Predicated region
    $region18: #{tpu_custom_call.1} parent=1 // pred_check
      _
    $region19: #{tpu_custom_call.1} parent=1 // pred_check_branch
      %149 = sbr.rel (0) target = $region21
    $region20: #{tpu_custom_call.1} parent=1 // pred_region
      %150 = dma.done [#allocation3], 128
    $region21: #{tpu_custom_call.1} parent=1 // pred_fallthru
      _
    %151 = vsyncpa [#allocation3], 1

</llo_original>
